<compile_context>
chip_gen: v6e
topology: v6e:2x2x1
jax: 0.10.0
libtpu: 0.0.40
codegen_flags: <defaults>
</compile_context>

<pallas_src>
import jax
import jax.numpy as jnp
from jax.experimental import pallas as pl
from jax.experimental.pallas import tpu as pltpu


def _normalize_kernel(x_ref, scale_ref, offset_ref, o_ref):
    # x_ref: (TM, TL); scale_ref / offset_ref: (TM, 1) broadcast along lanes.
    o_ref[...] = x_ref[...] * scale_ref[...] + offset_ref[...]


def _choose_tile(n, unit, max_tile):
    """Largest tile <= max_tile that divides n and is a multiple of `unit`,
    falling back to the full extent n (always legal for a BlockSpec)."""
    if n <= max_tile:
        return n
    if n % unit != 0:
        return n
    t = min(max_tile, n) // unit * unit
    while t > unit and n % t != 0:
        t -= unit
    return t if (t > 0 and n % t == 0) else n


def normalize_nchw(img, mean, std, *, max_tm=256, max_tl=2048):
    """(img - mean[None,:,None,None]) / std[None,:,None,None] via Pallas."""
    img = jnp.asarray(img, jnp.float32)
    mean = jnp.asarray(mean, jnp.float32).reshape(-1)
    std = jnp.asarray(std, jnp.float32).reshape(-1)

    squeeze = False
    if img.ndim == 3:          # accept (C, H, W) like the PyTorch module would
        img = img[None]
        squeeze = True
    N, C, H, W = img.shape
    M, L = N * C, H * W

    x2 = img.reshape(M, L)
    # Per-row affine parameters (tiny: M x 1 each), fused outside the kernel.
    scale = jnp.tile(1.0 / std, N).reshape(M, 1)
    offset = jnp.tile(-mean / std, N).reshape(M, 1)

    TM = _choose_tile(M, 8, max_tm)      # sublane tile (multiple of 8 or full)
    TL = _choose_tile(L, 128, max_tl)    # lane tile (multiple of 128 or full)
    grid = (M // TM, L // TL)

    out2 = pl.pallas_call(
        _normalize_kernel,
        out_shape=jax.ShapeDtypeStruct((M, L), jnp.float32),
        grid_spec=pl.GridSpec(
            grid=grid,
            in_specs=[
                pl.BlockSpec((TM, TL), lambda i, j: (i, j)),
                pl.BlockSpec((TM, 1), lambda i, j: (i, 0)),
                pl.BlockSpec((TM, 1), lambda i, j: (i, 0)),
            ],
            out_specs=pl.BlockSpec((TM, TL), lambda i, j: (i, j)),
        ),
        compiler_params=pltpu.CompilerParams(
            dimension_semantics=("parallel", "parallel")),
    )(x2, scale, offset)

    out = out2.reshape(N, C, H, W)
    return out[0] if squeeze else out


class NormalizationPallas:
    """JAX/Pallas equivalent of the PyTorch Normalization module."""
    default_mean = [0.485, 0.456, 0.406]
    default_std = [0.229, 0.224, 0.225]

    def __init__(self, mean=None, std=None):
        self.mean = jnp.asarray(
            self.default_mean if mean is None else mean, jnp.float32)
        self.std = jnp.asarray(
            self.default_std if std is None else std, jnp.float32)

    def __call__(self, img):
        return normalize_nchw(img, self.mean, self.std)


def _ref_normalize(img, mean, std):
    mean = jnp.asarray(mean, jnp.float32).reshape(1, -1, 1, 1)
    std = jnp.asarray(std, jnp.float32).reshape(1, -1, 1, 1)
    return (jnp.asarray(img, jnp.float32) - mean) / std


if __name__ == "__main__":
    key = jax.random.PRNGKey(0)
    # Small image-like input consistent with the module: N=2, C=3 (ImageNet
    # mean/std have 3 channels), H=W=16, values in [0, 1].
    x = jax.random.uniform(key, (2, 3, 16, 16), dtype=jnp.float32)

    module = NormalizationPallas()
    out = jax.block_until_ready(module(x))

    ref = _ref_normalize(x, NormalizationPallas.default_mean,
                         NormalizationPallas.default_std)

    assert out.shape == x.shape
    assert jnp.allclose(out, ref, atol=1e-6, rtol=1e-6)

    print("KERNEL_OK")
</pallas_src>

<mosaic_0001>
module attributes {stable_mosaic.version = 11 : i64} {
  func.func @_normalize_kernel(%arg0: i32, %arg1: i32, %arg2: memref<6x256xf32, #tpu.memory_space<vmem>>, %arg3: memref<6x1xf32, #tpu.memory_space<vmem>>, %arg4: memref<6x1xf32, #tpu.memory_space<vmem>>, %arg5: memref<6x256xf32, #tpu.memory_space<vmem>>) attributes {dimension_semantics = [#tpu.dimension_semantics<parallel>, #tpu.dimension_semantics<parallel>], iteration_bounds = array<i64: 1, 1>, scalar_prefetch = 0 : i64, scratch_operands = 0 : i64, tpu.core_type = #tpu.core_type<tc>, window_params = [{transform_indices = @transform_0, window_bounds = array<i64: 6, 256>}, {transform_indices = @transform_1, window_bounds = array<i64: 6, 1>}, {transform_indices = @transform_2, window_bounds = array<i64: 6, 1>}, {transform_indices = @transform_3, window_bounds = array<i64: 6, 256>}]} {
    %c0 = arith.constant 0 : index
    %c0_0 = arith.constant 0 : index
    %0 = vector.load %arg2[%c0, %c0_0] : memref<6x256xf32, #tpu.memory_space<vmem>>, vector<6x256xf32>
    %c0_1 = arith.constant 0 : index
    %c0_2 = arith.constant 0 : index
    %1 = vector.load %arg3[%c0_1, %c0_2] : memref<6x1xf32, #tpu.memory_space<vmem>>, vector<6x1xf32>
    %2 = vector.broadcast %1 : vector<6x1xf32> to vector<6x256xf32>
    %3 = arith.mulf %0, %2 : vector<6x256xf32>
    %c0_3 = arith.constant 0 : index
    %c0_4 = arith.constant 0 : index
    %4 = vector.load %arg4[%c0_3, %c0_4] : memref<6x1xf32, #tpu.memory_space<vmem>>, vector<6x1xf32>
    %5 = vector.broadcast %4 : vector<6x1xf32> to vector<6x256xf32>
    %6 = arith.addf %3, %5 : vector<6x256xf32>
    %c0_5 = arith.constant 0 : index
    %c0_6 = arith.constant 0 : index
    %7 = vector.load %arg5[%c0_5, %c0_6] : memref<6x256xf32, #tpu.memory_space<vmem>>, vector<6x256xf32>
    tpu.vector_store %arg5[%c0_5, %c0_6], %6 {strides = array<i32>} : memref<6x256xf32, #tpu.memory_space<vmem>>, vector<6x256xf32>,
    return
  }
  func.func @transform_0(%arg0: i32, %arg1: i32) -> (i32, i32) {
    %c0_i32 = arith.constant 0 : i32
    return %arg0, %arg1 : i32, i32
  }
  func.func @transform_1(%arg0: i32, %arg1: i32) -> (i32, i32) {
    %c0_i32 = arith.constant 0 : i32
    %c0_i32_0 = arith.constant 0 : i32
    return %arg0, %c0_i32 : i32, i32
  }
  func.func @transform_2(%arg0: i32, %arg1: i32) -> (i32, i32) {
    %c0_i32 = arith.constant 0 : i32
    %c0_i32_0 = arith.constant 0 : i32
    return %arg0, %c0_i32 : i32, i32
  }
  func.func @transform_3(%arg0: i32, %arg1: i32) -> (i32, i32) {
    %c0_i32 = arith.constant 0 : i32
    return %arg0, %arg1 : i32, i32
  }
}

</mosaic_0001>

<llo_original>
// kernel: tpu_custom_call.1
$region0: #{tpu_custom_call.1}
  #allocation0 [shape = 'u32[]', space=smem, size = 0x4, offset = 0x4, fixed_abs, tag = 'smem constant byte address 0x4 - core index']
  #allocation1 [shape = 'u32[144,128]{1,0:T(1,128)}', space=vmem, size = 0x12000, scoped, tag = 'internal scratch']
  %s0 = inlined_call_operand.vmem [shape: f32[6,256], index: 0, kind: input, shape index: {}]
  %s1 = inlined_call_operand.vmem [shape: f32[6,1], index: 1, kind: input, shape index: {}]
  %s2 = inlined_call_operand.vmem [shape: f32[6,1], index: 2, kind: input, shape index: {}]
  %s3 = inlined_call_operand.hbm [shape: f32[6,256], index: 3, kind: output, shape index: {}]
  %s4 = sld [smem:[#allocation0]]
  $region22: #{tpu_custom_call.1} parent=0
    _
  %s6 = ssub.s32 1, %s4
  %s7 = scalar_select 0, %s6, %s4
  $region1: #{tpu_custom_call.1} parent=0
    #allocation2 [shape = 'u8[8192]{0}', space=vmem, size = 0x2000, scoped, tag = 'output window, operand 0, single buffered']
    #allocation3 [shape = 's32[1]{0}', space=sflag, size = 0x4, scoped, tag = 'scoped memory for tpu_custom_call.1']
    %8 = vsyncpa [#allocation3], 0
    // Predicated region
    $region2: #{tpu_custom_call.1} parent=1 // pred_check
      _
    $region3: #{tpu_custom_call.1} parent=1 // pred_check_branch
      %10 = sbr.rel (0) target = $region5
    $region4: #{tpu_custom_call.1} parent=1 // pred_region
      _
    $region5: #{tpu_custom_call.1} parent=1 // pred_fallthru
      _
    // Predicated region
    $region6: #{tpu_custom_call.1} parent=1 // pred_check
      _
    $region7: #{tpu_custom_call.1} parent=1 // pred_check_branch
      %12 = sbr.rel (0) target = $region9
    $region8: #{tpu_custom_call.1} parent=1 // pred_region
      _
    $region9: #{tpu_custom_call.1} parent=1 // pred_fallthru
      _
    // Predicated region
    $region10: #{tpu_custom_call.1} parent=1 // pred_check
      _
    $region11: #{tpu_custom_call.1} parent=1 // pred_check_branch
      %14 = sbr.rel (0) target = $region13
    $region12: #{tpu_custom_call.1} parent=1 // pred_region
      _
    $region13: #{tpu_custom_call.1} parent=1 // pred_fallthru
      _
    %v15 = vld [vmem:[%s0] sm:$0x3f]
    %v16 = vld [vmem:[%s0 + $0x8] sm:$0x3f]
    %v17 = vld [vmem:[%s1] sm:$0x3f]
    %19 = vset.pattern.permute.xlu0 0
    %20 = vperm.xlu0 %19, %v17
    %v21 = vpop.permute.xlu0 %20
    %v23 = vmul.f32 %v15, %v21
    %v24 = vmul.f32 %v16, %v21
    %v25 = vld [vmem:[%s2] sm:$0x3f]
    %27 = vset.pattern.permute.xlu0 0
    %28 = vperm.xlu0 %27, %v25
    %v29 = vpop.permute.xlu0 %28
    %v31 = vadd.f32 %v23, %v29
    %v32 = vadd.f32 %v24, %v29
    %33 = vst [vmem:[#allocation2] sm:$0x3f] %v31
    %34 = vst [vmem:[#allocation2 + $0x8] sm:$0x3f] %v32
    // Predicated region
    $region14: #{tpu_custom_call.1} parent=1 // pred_check
      _
    $region15: #{tpu_custom_call.1} parent=1 // pred_check_branch
      %36 = sbr.rel (0) target = $region17
    $region16: #{tpu_custom_call.1} parent=1 // pred_region
      %s38 = ssub.s32 256, 256
      %39 = vsyncadd [#allocation3], %s38
      %s41 = sshll.u32 [#allocation2], 4
      %s42 = int_to_ptr.vmem [resolvable:$true] %s41
      %44 = dma.vmem_to_hbm [thread:$0]  %s42, 256, %s3, [#allocation3]
    $region17: #{tpu_custom_call.1} parent=1 // pred_fallthru
      _
    // Predicated region
    $region18: #{tpu_custom_call.1} parent=1 // pred_check
      _
    $region19: #{tpu_custom_call.1} parent=1 // pred_check_branch
      %46 = sbr.rel (0) target = $region21
    $region20: #{tpu_custom_call.1} parent=1 // pred_region
      %47 = dma.done [#allocation3], 256
    $region21: #{tpu_custom_call.1} parent=1 // pred_fallthru
      _
    %48 = vsyncpa [#allocation3], 1

</llo_original>
